<compile_context>
chip_gen: v7x
topology: tpu7x:2x2x1
jax: 0.10.0
libtpu: 0.0.40
codegen_flags: <defaults>
</compile_context>

<pallas_src>
import math

import jax
import jax.numpy as jnp
from jax.experimental import pallas as pl
from jax.experimental.pallas import tpu as pltpu

LOG_2PI = math.log(2.0 * math.pi)
TWO_PI = 2.0 * math.pi


def base_sampler_kernel(u1_ref, u2_ref, out_ref):
    """One grid step fills a transposed (dim + 1, tile_n) slab [x ; log_j].

    u1_ref, u2_ref : (dim // 2, tile_n) float32 uniforms in [0, 1)
    out_ref        : (dim + 1, tile_n) float32
    """
    dim = out_ref.shape[0] - 1
    dh = dim // 2

    # Box-Muller, using BOTH branches (cos and sin) so each uniform pair
    # yields two standard-normal rows.
    u1 = 1.0 - u1_ref[...]                 # (0, 1]  -> safe for log
    u2 = u2_ref[...]                       # [0, 1)
    r = jnp.sqrt(-2.0 * jnp.log(u1))       # (dh, tile_n)
    theta = TWO_PI * u2
    z1 = r * jnp.cos(theta)                # (dh, tile_n)
    z2 = r * jnp.sin(theta)                # (dh, tile_n)

    # log_prob(x) summed over dim for a standard Normal prior:
    #   sum_d [ -0.5 * x_d^2 - 0.5 * log(2*pi) ]
    # Reduction is over the small sublane axis (lane-dense result row).
    sumsq = (jnp.sum(z1 * z1, axis=0, keepdims=True)
             + jnp.sum(z2 * z2, axis=0, keepdims=True))    # (1, tile_n)
    log_j = 0.5 * sumsq + (0.5 * dim * LOG_2PI)            # = -log_prob

    # Full-lane-width stores of the transposed output slab.
    out_ref[0:dh, :] = z1
    out_ref[dh:dim, :] = z2
    out_ref[dim:dim + 1, :] = log_j


def base_sampler_forward(n_points: int, dim: int, key,
                         tile_n: int | None = None) -> jax.Array:
    """Pallas equivalent of BaseSampler.forward(n_points) with a N(0,1) prior."""
    assert dim % 2 == 0, "dim must be even (Box-Muller pair reuse)"
    dh = dim // 2

    if tile_n is None:
        tile_n = 2048 if n_points % 2048 == 0 else n_points
    assert n_points % tile_n == 0, "n_points must be a multiple of tile_n"
    assert tile_n % 128 == 0 or tile_n == n_points, \
        "tile_n must be a multiple of 128 (or equal n_points)"

    # Deterministic uniforms in the lane-dense (feature, points) layout.
    k1, k2 = jax.random.split(key)
    u1 = jax.random.uniform(k1, (dh, n_points), dtype=jnp.float32)
    u2 = jax.random.uniform(k2, (dh, n_points), dtype=jnp.float32)

    grid = (n_points // tile_n,)
    out_t = pl.pallas_call(
        base_sampler_kernel,
        out_shape=jax.ShapeDtypeStruct((dim + 1, n_points), jnp.float32),
        grid=grid,
        in_specs=[
            pl.BlockSpec((dh, tile_n), lambda i: (0, i)),
            pl.BlockSpec((dh, tile_n), lambda i: (0, i)),
        ],
        out_specs=pl.BlockSpec((dim + 1, tile_n), lambda i: (0, i)),
        compiler_params=pltpu.CompilerParams(
            dimension_semantics=("parallel",),
        ),
    )(u1, u2)

    # Restore the module's (n_points, dim + 1) row-major contract.
    return out_t.T


if __name__ == "__main__":
    # Small shapes consistent with the module: n_points=256, dim=8.
    dim = 8
    n_points = 256

    key = jax.random.PRNGKey(0)
    out = base_sampler_forward(n_points, dim, key)
    out = jax.block_until_ready(out)

    assert out.shape == (n_points, dim + 1), out.shape
    assert out.dtype == jnp.float32

    # Self-consistency: last column must equal -sum(log N(x; 0, 1), -1)
    # recomputed in plain JAX from the sampled x columns.
    x = out[:, :dim]
    log_j_ref = -jnp.sum(-0.5 * x * x - 0.5 * LOG_2PI, axis=-1)
    assert bool(jnp.allclose(out[:, dim], log_j_ref, atol=1e-4, rtol=1e-5))

    # Sanity: samples look standard-normal-ish (loose bounds, deterministic key).
    assert bool(jnp.abs(jnp.mean(x)) < 0.2)
    assert bool(jnp.abs(jnp.std(x) - 1.0) < 0.2)

    print("KERNEL_OK")
</pallas_src>

<mosaic_0001>
module attributes {stable_mosaic.version = 11 : i64} {
  func.func @base_sampler_kernel(%arg0: i32, %arg1: memref<4x256xf32, #tpu.memory_space<vmem>>, %arg2: memref<4x256xf32, #tpu.memory_space<vmem>>, %arg3: memref<9x256xf32, #tpu.memory_space<vmem>>) attributes {dimension_semantics = [#tpu.dimension_semantics<parallel>], iteration_bounds = array<i64: 1>, scalar_prefetch = 0 : i64, scratch_operands = 0 : i64, tpu.core_type = #tpu.core_type<tc>, window_params = [{transform_indices = @transform_0, window_bounds = array<i64: 4, 256>}, {transform_indices = @transform_1, window_bounds = array<i64: 4, 256>}, {transform_indices = @transform_2, window_bounds = array<i64: 9, 256>}]} {
    %c0 = arith.constant 0 : index
    %c0_0 = arith.constant 0 : index
    %0 = vector.load %arg1[%c0, %c0_0] : memref<4x256xf32, #tpu.memory_space<vmem>>, vector<4x256xf32>
    %cst = arith.constant 1.000000e+00 : f32
    %1 = vector.broadcast %cst : f32 to vector<4x256xf32>
    %2 = arith.subf %1, %0 : vector<4x256xf32>
    %c0_1 = arith.constant 0 : index
    %c0_2 = arith.constant 0 : index
    %3 = vector.load %arg2[%c0_1, %c0_2] : memref<4x256xf32, #tpu.memory_space<vmem>>, vector<4x256xf32>
    %4 = math.log %2 : vector<4x256xf32>
    %cst_3 = arith.constant -2.000000e+00 : f32
    %5 = vector.broadcast %cst_3 : f32 to vector<4x256xf32>
    %6 = arith.mulf %5, %4 : vector<4x256xf32>
    %7 = math.sqrt %6 : vector<4x256xf32>
    %cst_4 = arith.constant 6.28318548 : f32
    %8 = vector.broadcast %cst_4 : f32 to vector<4x256xf32>
    %9 = arith.mulf %8, %3 : vector<4x256xf32>
    %10 = math.cos %9 : vector<4x256xf32>
    %11 = arith.mulf %7, %10 : vector<4x256xf32>
    %12 = math.sin %9 : vector<4x256xf32>
    %13 = arith.mulf %7, %12 : vector<4x256xf32>
    %14 = arith.mulf %11, %11 : vector<4x256xf32>
    %cst_5 = arith.constant dense<0.000000e+00> : vector<256xf32>
    %15 = vector.multi_reduction <add>, %14, %cst_5 [0] : vector<4x256xf32> to vector<256xf32>
    %16 = vector.shape_cast %15 : vector<256xf32> to vector<1x256xf32>
    %17 = arith.mulf %13, %13 : vector<4x256xf32>
    %cst_6 = arith.constant dense<0.000000e+00> : vector<256xf32>
    %18 = vector.multi_reduction <add>, %17, %cst_6 [0] : vector<4x256xf32> to vector<256xf32>
    %19 = vector.shape_cast %18 : vector<256xf32> to vector<1x256xf32>
    %20 = arith.addf %16, %19 : vector<1x256xf32>
    %cst_7 = arith.constant 5.000000e-01 : f32
    %21 = vector.broadcast %cst_7 : f32 to vector<1x256xf32>
    %22 = arith.mulf %21, %20 : vector<1x256xf32>
    %cst_8 = arith.constant 7.35150814 : f32
    %23 = vector.broadcast %cst_8 : f32 to vector<1x256xf32>
    %24 = arith.addf %22, %23 : vector<1x256xf32>
    %c0_9 = arith.constant 0 : index
    %c0_10 = arith.constant 0 : index
    %25 = vector.load %arg3[%c0_9, %c0_10] : memref<9x256xf32, #tpu.memory_space<vmem>>, vector<4x256xf32>
    tpu.vector_store %arg3[%c0_9, %c0_10], %11 {strides = array<i32>} : memref<9x256xf32, #tpu.memory_space<vmem>>, vector<4x256xf32>,
    %c4 = arith.constant 4 : index
    %c0_11 = arith.constant 0 : index
    %26 = vector.load %arg3[%c4, %c0_11] : memref<9x256xf32, #tpu.memory_space<vmem>>, vector<4x256xf32>
    tpu.vector_store %arg3[%c4, %c0_11], %13 {strides = array<i32>} : memref<9x256xf32, #tpu.memory_space<vmem>>, vector<4x256xf32>,
    %c8 = arith.constant 8 : index
    %c0_12 = arith.constant 0 : index
    %27 = vector.load %arg3[%c8, %c0_12] : memref<9x256xf32, #tpu.memory_space<vmem>>, vector<1x256xf32>
    tpu.vector_store %arg3[%c8, %c0_12], %24 {strides = array<i32>} : memref<9x256xf32, #tpu.memory_space<vmem>>, vector<1x256xf32>,
    return
  }
  func.func @transform_0(%arg0: i32) -> (i32, i32) {
    %c0_i32 = arith.constant 0 : i32
    %c0_i32_0 = arith.constant 0 : i32
    return %c0_i32, %arg0 : i32, i32
  }
  func.func @transform_1(%arg0: i32) -> (i32, i32) {
    %c0_i32 = arith.constant 0 : i32
    %c0_i32_0 = arith.constant 0 : i32
    return %c0_i32, %arg0 : i32, i32
  }
  func.func @transform_2(%arg0: i32) -> (i32, i32) {
    %c0_i32 = arith.constant 0 : i32
    %c0_i32_0 = arith.constant 0 : i32
    return %c0_i32, %arg0 : i32, i32
  }
}

</mosaic_0001>

<llo_original>
// kernel: tpu_custom_call.1
$region0: #{tpu_custom_call.1}
  #allocation0 [shape = 'u32[]', space=smem, size = 0x4, offset = 0x4, fixed_abs, tag = 'smem constant byte address 0x4 - core index']
  #allocation1 [shape = 'u32[144,128]{1,0:T(1,128)}', space=vmem, size = 0x12000, scoped, tag = 'internal scratch']
  %s0 = inlined_call_operand.hbm [shape: f32[4,256], index: 0, kind: input, shape index: {}]
  %s1 = inlined_call_operand.hbm [shape: f32[4,256], index: 1, kind: input, shape index: {}]
  %s2 = inlined_call_operand.hbm [shape: f32[9,256], index: 2, kind: output, shape index: {}]
  %s3 = sld [smem:[#allocation0]]
  $region26: #{tpu_custom_call.1} parent=0
    _
  %s5 = ssub.s32 1, %s3
  %s6 = scalar_select 0, %s5, %s3
  $region1: #{tpu_custom_call.1} parent=0
    #allocation2 [shape = 'u8[4096]{0}', space=vmem, size = 0x1000, scoped, tag = 'input window, operand 0, single buffered']
    #allocation3 [shape = 's32[1]{0}', space=sflag, size = 0x4, scoped, tag = 'scoped memory for tpu_custom_call.1']
    #allocation4 [shape = 's32[1]{0}', space=sflag, size = 0x4, scoped, tag = 'scoped memory for tpu_custom_call.1']
    #allocation5 [shape = 'u8[4096]{0}', space=vmem, size = 0x1000, scoped, tag = 'input window, operand 1, single buffered']
    #allocation6 [shape = 's32[1]{0}', space=sflag, size = 0x4, scoped, tag = 'scoped memory for tpu_custom_call.1']
    #allocation7 [shape = 'u8[16384]{0}', space=vmem, size = 0x4000, scoped, tag = 'output window, operand 0, single buffered']
    %7 = vsyncpa [#allocation3], 0
    %8 = vsyncpa [#allocation6], 0
    %9 = vsyncpa [#allocation4], 0
    // Predicated region
    $region2: #{tpu_custom_call.1} parent=1 // pred_check
      _
    $region3: #{tpu_custom_call.1} parent=1 // pred_check_branch
      %11 = sbr.rel (0) target = $region5
    $region4: #{tpu_custom_call.1} parent=1 // pred_region
      %s13 = ssub.s32 128, 128
      %14 = vsyncadd [#allocation3], %s13
      %s16 = sshll.u32 [#allocation2], 4
      %s17 = int_to_ptr.vmem [resolvable:$true] %s16
      %19 = dma.hbm_to_vmem [thread:$0]  %s0, 128, %s17, [#allocation3]
    $region5: #{tpu_custom_call.1} parent=1 // pred_fallthru
      _
    // Predicated region
    $region6: #{tpu_custom_call.1} parent=1 // pred_check
      _
    $region7: #{tpu_custom_call.1} parent=1 // pred_check_branch
      %21 = sbr.rel (0) target = $region9
    $region8: #{tpu_custom_call.1} parent=1 // pred_region
      %s23 = ssub.s32 128, 128
      %24 = vsyncadd [#allocation6], %s23
      %s26 = sshll.u32 [#allocation5], 4
      %s27 = int_to_ptr.vmem [resolvable:$true] %s26
      %29 = dma.hbm_to_vmem [thread:$0]  %s1, 128, %s27, [#allocation6]
    $region9: #{tpu_custom_call.1} parent=1 // pred_fallthru
      _
    // Predicated region
    $region10: #{tpu_custom_call.1} parent=1 // pred_check
      _
    $region11: #{tpu_custom_call.1} parent=1 // pred_check_branch
      %31 = sbr.rel (0) target = $region13
    $region12: #{tpu_custom_call.1} parent=1 // pred_region
      %32 = dma.done [#allocation3], 128
    $region13: #{tpu_custom_call.1} parent=1 // pred_fallthru
      _
    // Predicated region
    $region14: #{tpu_custom_call.1} parent=1 // pred_check
      _
    $region15: #{tpu_custom_call.1} parent=1 // pred_check_branch
      %34 = sbr.rel (0) target = $region17
    $region16: #{tpu_custom_call.1} parent=1 // pred_region
      %35 = dma.done [#allocation6], 128
    $region17: #{tpu_custom_call.1} parent=1 // pred_fallthru
      _
    %v36 = vld [vmem:[#allocation2] sm:$0xff]
    %v37 = vsub.f32 1.0, %v36
    %v38 = vld [vmem:[#allocation5] sm:$0xff]
    %v39 = vlog2.pop %v37
    %v40 = vmul.f32 %v39, 0.6931472
    %v41 = vmul.f32 %v40, -2.0
    %v42 = vrsqrt.pop %v41
    %v43 = vmul.f32 %v41, %v42
    %vm44 = vcmp.eq.f32.partialorder %v41, inf
    %v45 = vsel %vm44, %v41, %v43
    %vm46 = vcmp.eq.f32.partialorder %v41, 0.0
    %v47 = vand.u32 %v41, 2147483648
    %v48 = vsel %vm46, %v47, %v45
    %v49 = vmul.f32 %v38, 6.2831855
    %v50 = vand.u32 2147483647, %v49
    %vm51 = vcmp.le.f32.partialorder %v50, 0.7853982
    %vm52 = vcmp.lt.s32.totalorder %v49, 0
    %v53 = vand.u32 %v49, 2139095040
    %v54 = vshrl.u32 %v53, 23
    %v55 = vsub.s32 %v54, 127
    %v56 = vand.u32 2147483647, %v49
    %v57 = vand.u32 %v56, 8388607
    %v58 = vor.u32 %v57, 8388608
    %v59 = vsub.s32 0, %v58
    %v60 = vadd.s32 %v55, 1
    %vm61 = vcmp.gt.s32.totalorder %v60, 0
    %v62 = vsel %vm61, %v60, 0
    %v63 = vshrl.u32 %v62, 5
    %v64 = vand.u32 %v62, 31
    %v65 = vsub.s32 32, %v64
    %v66 = vshrl.u32 683565275, %v65
    %v67 = vshll.u32 683565275, %v64
    %v68 = vshrl.u32 2475754826, %v65
    %v69 = vor.u32 %v67, %v68
    %v70 = vshll.u32 2475754826, %v64
    %v71 = vshrl.u32 2131351028, %v65
    %v72 = vor.u32 %v70, %v71
    %v73 = vshll.u32 2131351028, %v64
    %v74 = vshrl.u32 2102212464, %v65
    %v75 = vor.u32 %v73, %v74
    %v76 = vshll.u32 2102212464, %v64
    %v77 = vshrl.u32 920167782, %v65
    %v78 = vor.u32 %v76, %v77
    %v79 = vshll.u32 920167782, %v64
    %v80 = vshrl.u32 1326507024, %v65
    %v81 = vor.u32 %v79, %v80
    %vm82 = vcmp.lt.s32.totalorder %v63, 1
    %vm83 = vcmp.lt.s32.totalorder %v63, 2
    %vm84 = vcmp.lt.s32.totalorder %v63, 3
    %vm85 = vcmp.lt.s32.totalorder %v63, 4
    %v86 = vsel %vm82, %v66, %v69
    %v87 = vsel %vm85, %v75, 2102212464
    %v88 = vsel %vm84, %v72, %v87
    %v89 = vsel %vm83, %v86, %v88
    %v90 = vsel %vm82, %v69, %v72
    %v91 = vsel %vm85, %v78, 920167782
    %v92 = vsel %vm84, %v75, %v91
    %v93 = vsel %vm83, %v90, %v92
    %v94 = vsel %vm82, %v72, %v75
    %v95 = vsel %vm85, %v81, 1326507024
    %v96 = vsel %vm84, %v78, %v95
    %v97 = vsel %vm83, %v94, %v96
    %v98 = vshll.u32 %v58, 8
    %v99 = vmul.u32.u64.compose %v98, %v97
    %v100 = vextract.low.u32 %v99
    %v101 = vextract.high.u32 %v99
    %v102 = vmul.u32.u64.compose %v98, %v93
    %v103 = vextract.low.u32 %v102
    %v104 = vextract.high.u32 %v102
    %v105 = vmul.u32 %v98, %v89
    %v106 = vadd.s32 %v101, %v103
    %vm107 = vc.u32 %v101, %v103
    %v108 = vadd.s32 %v104, 1
    %v109 = vsel %vm107, %v108, %v104
    %v110 = vadd.s32 %v105, %v109
    %v111 = vadd.s32 %v110, 536870912
    %v112 = vshrl.u32 %v111, 30
    %v113 = vshll.u32 %v112, 30
    %v114 = vsub.s32 %v110, %v113
    %vm115 = vcmp.lt.s32.totalorder %v114, 0
    %v116 = vsub.s32 0, %v114
    %v117 = vsel %vm115, %v116, %v114
    %v118 = vclz %v117
    %v119 = vsub.s32 %v118, 2
    %vm120 = vcmp.gt.s32.totalorder 0, %v119
    %v121 = vsel %vm120, 0, %v119
    %v122 = vsub.s32 32, %v121
    %v123 = vshll.u32 %v114, %v121
    %v124 = vshrl.u32 %v106, %v122
    %v125 = vor.u32 %v123, %v124
    %v126 = vsub.s32 4294967266, %v121
    %v127 = vadd.s32 %v126, 127
    %v128 = vshll.u32 %v127, 23
    %v129 = vor.u32 4788187, %v128
    %v130 = vand.u32 2147483647, %v129
    %v132 = vcvt.s32.f32 %v125
    %v133 = vmul.f32 %v132, %v130
    %v134 = vxor.u32 %v133, 2147483648
    %v135 = vsel %vm52, %v134, %v133
    %v136 = vsub.s32 4, %v112
    %v137 = vsel %vm52, %v136, %v112
    %v138 = vsel %vm51, %v49, %v135
    %v139 = vsel %vm51, 0, %v137
    %v140 = vcosq.f32.pop %v138
    %v141 = vsinq.f32.pop %v138
    %vm142 = vweird.f32 %v49
    %v143 = vand.u32 %v139, 3
    %vm144 = vcmp.lt.s32.totalorder %v143, 2
    %vm145 = vcmp.eq.s32.totalorder %v143, 0
    %v146 = vxor.u32 %v141, 2147483648
    %v147 = vsel %vm145, %v140, %v146
    %vm148 = vcmp.eq.s32.totalorder %v143, 2
    %v149 = vxor.u32 %v140, 2147483648
    %v150 = vsel %vm148, %v149, %v141
    %v151 = vsel %vm144, %v147, %v150
    %v152 = vsel %vm142, nan, %v151
    %v153 = vmul.f32 %v48, %v152
    %v154 = vand.u32 2147483647, %v49
    %vm155 = vcmp.le.f32.partialorder %v154, 0.7853982
    %vm156 = vcmp.lt.s32.totalorder %v49, 0
    %v157 = vand.u32 %v49, 2139095040
    %v158 = vshrl.u32 %v157, 23
    %v159 = vsub.s32 %v158, 127
    %v160 = vand.u32 2147483647, %v49
    %v161 = vand.u32 %v160, 8388607
    %v162 = vor.u32 %v161, 8388608
    %v163 = vsub.s32 0, %v162
    %v164 = vadd.s32 %v159, 1
    %vm165 = vcmp.gt.s32.totalorder %v164, 0
    %v166 = vsel %vm165, %v164, 0
    %v167 = vshrl.u32 %v166, 5
    %v168 = vand.u32 %v166, 31
    %v169 = vsub.s32 32, %v168
    %v170 = vshrl.u32 683565275, %v169
    %v171 = vshll.u32 683565275, %v168
    %v172 = vshrl.u32 2475754826, %v169
    %v173 = vor.u32 %v171, %v172
    %v174 = vshll.u32 2475754826, %v168
    %v175 = vshrl.u32 2131351028, %v169
    %v176 = vor.u32 %v174, %v175
    %v177 = vshll.u32 2131351028, %v168
    %v178 = vshrl.u32 2102212464, %v169
    %v179 = vor.u32 %v177, %v178
    %v180 = vshll.u32 2102212464, %v168
    %v181 = vshrl.u32 920167782, %v169
    %v182 = vor.u32 %v180, %v181
    %v183 = vshll.u32 920167782, %v168
    %v184 = vshrl.u32 1326507024, %v169
    %v185 = vor.u32 %v183, %v184
    %vm186 = vcmp.lt.s32.totalorder %v167, 1
    %vm187 = vcmp.lt.s32.totalorder %v167, 2
    %vm188 = vcmp.lt.s32.totalorder %v167, 3
    %vm189 = vcmp.lt.s32.totalorder %v167, 4
    %v190 = vsel %vm186, %v170, %v173
    %v191 = vsel %vm189, %v179, 2102212464
    %v192 = vsel %vm188, %v176, %v191
    %v193 = vsel %vm187, %v190, %v192
    %v194 = vsel %vm186, %v173, %v176
    %v195 = vsel %vm189, %v182, 920167782
    %v196 = vsel %vm188, %v179, %v195
    %v197 = vsel %vm187, %v194, %v196
    %v198 = vsel %vm186, %v176, %v179
    %v199 = vsel %vm189, %v185, 1326507024
    %v200 = vsel %vm188, %v182, %v199
    %v201 = vsel %vm187, %v198, %v200
    %v202 = vshll.u32 %v162, 8
    %v203 = vmul.u32.u64.compose %v202, %v201
    %v204 = vextract.low.u32 %v203
    %v205 = vextract.high.u32 %v203
    %v206 = vmul.u32.u64.compose %v202, %v197
    %v207 = vextract.low.u32 %v206
    %v208 = vextract.high.u32 %v206
    %v209 = vmul.u32 %v202, %v193
    %v210 = vadd.s32 %v205, %v207
    %vm211 = vc.u32 %v205, %v207
    %v212 = vadd.s32 %v208, 1
    %v213 = vsel %vm211, %v212, %v208
    %v214 = vadd.s32 %v209, %v213
    %v215 = vadd.s32 %v214, 536870912
    %v216 = vshrl.u32 %v215, 30
    %v217 = vshll.u32 %v216, 30
    %v218 = vsub.s32 %v214, %v217
    %vm219 = vcmp.lt.s32.totalorder %v218, 0
    %v220 = vsub.s32 0, %v218
    %v221 = vsel %vm219, %v220, %v218
    %v222 = vclz %v221
    %v223 = vsub.s32 %v222, 2
    %vm224 = vcmp.gt.s32.totalorder 0, %v223
    %v225 = vsel %vm224, 0, %v223
    %v226 = vsub.s32 32, %v225
    %v227 = vshll.u32 %v218, %v225
    %v228 = vshrl.u32 %v210, %v226
    %v229 = vor.u32 %v227, %v228
    %v230 = vsub.s32 4294967266, %v225
    %v231 = vadd.s32 %v230, 127
    %v232 = vshll.u32 %v231, 23
    %v233 = vor.u32 4788187, %v232
    %v234 = vand.u32 2147483647, %v233
    %v236 = vcvt.s32.f32 %v229
    %v237 = vmul.f32 %v236, %v234
    %v238 = vxor.u32 %v237, 2147483648
    %v239 = vsel %vm156, %v238, %v237
    %v240 = vsub.s32 4, %v216
    %v241 = vsel %vm156, %v240, %v216
    %v242 = vsel %vm155, %v49, %v239
    %v243 = vsel %vm155, 0, %v241
    %v244 = vcosq.f32.pop %v242
    %v245 = vsinq.f32.pop %v242
    %vm246 = vweird.f32 %v49
    %v247 = vadd.s32 %v243, 3
    %v248 = vand.u32 %v247, 3
    %vm249 = vcmp.lt.s32.totalorder %v248, 2
    %vm250 = vcmp.eq.s32.totalorder %v248, 0
    %v251 = vxor.u32 %v245, 2147483648
    %v252 = vsel %vm250, %v244, %v251
    %vm253 = vcmp.eq.s32.totalorder %v248, 2
    %v254 = vxor.u32 %v244, 2147483648
    %v255 = vsel %vm253, %v254, %v245
    %v256 = vsel %vm249, %v252, %v255
    %v257 = vsel %vm246, nan, %v256
    %v258 = vmul.f32 %v48, %v257
    %v259 = vmul.f32 %v153, %v153
    %v261 = vcombine.high %v259, %v259
    %vm263 = vcmask 1043456
    %v264 = vsel %vm263, %v259, 0.0
    %v265 = vrot.slane %v264, 4
    %v266 = vadd.f32 %v264, %v265
    %v267 = vrot.slane %v266, 2
    %v268 = vadd.f32 %v266, %v267
    %v269 = vrot.slane %v268, 1
    %v270 = vadd.f32 %v268, %v269
    %v271 = vsel %vm263, %v261, 0.0
    %v272 = vrot.slane %v271, 4
    %v273 = vadd.f32 %v271, %v272
    %v274 = vrot.slane %v273, 2
    %v275 = vadd.f32 %v273, %v274
    %v276 = vrot.slane %v275, 1
    %v277 = vadd.f32 %v275, %v276
    %v278 = vmul.f32 %v258, %v258
    %v280 = vcombine.high %v278, %v278
    %v282 = vsel %vm263, %v278, 0.0
    %v283 = vrot.slane %v282, 4
    %v284 = vadd.f32 %v282, %v283
    %v285 = vrot.slane %v284, 2
    %v286 = vadd.f32 %v284, %v285
    %v287 = vrot.slane %v286, 1
    %v288 = vadd.f32 %v286, %v287
    %v289 = vsel %vm263, %v280, 0.0
    %v290 = vrot.slane %v289, 4
    %v291 = vadd.f32 %v289, %v290
    %v292 = vrot.slane %v291, 2
    %v293 = vadd.f32 %v291, %v292
    %v294 = vrot.slane %v293, 1
    %v295 = vadd.f32 %v293, %v294
    %v296 = vadd.f32 %v270, %v288
    %v297 = vadd.f32 %v277, %v295
    %v298 = vmul.f32 %v296, 0.5
    %v299 = vmul.f32 %v297, 0.5
    %v300 = vadd.f32 %v298, 7.351508
    %v301 = vadd.f32 %v299, 7.351508
    %v303 = vcombine.high %v153, %v153
    %305 = vst [vmem:[#allocation7] sm:$0xf] %v153
    %306 = vst [vmem:[#allocation7 + $0x8] sm:$0xf] %v303
    %v308 = vcombine.low %v258, %v258
    %310 = vst [vmem:[#allocation7] sm:$0xf0] %v308
    %311 = vst [vmem:[#allocation7 + $0x8] sm:$0xf0] %v258
    %v314 = vcombine.low %v300, %v301
    %v316 = vunpack.c.l.s4 1966171168
    %v317 = vunpack.c.0.s8 %v316
    %v318 = vlaneseq
    %v319 = vshrl.u32 %v318, 7
    %v320 = vsub.s32 %v317, %v319
    %v321 = vrot.slane %v314, %v320
    %v323 = vunpack.c.l.s4 1966171168
    %v324 = vunpack.c.0.s8 %v323
    %v325 = vlaneseq
    %v326 = vshrl.u32 %v325, 7
    %v327 = vsub.s32 %v324, %v326
    %v328 = vrot.slane %v321, %v327
    %v330 = vlaneseq
    %vm331 = vcmp.ge.s32.totalorder %v330, 0
    %vm332 = vcmp.lt.s32.totalorder %v330, 256
    %vm333 = vmand %vm331, %vm332
    %s334 = scalar_lea.vmem [#allocation7], 16
    %335 = vst.msk [vmem:[%s334] ss:$8 sm:$0x3] %vm333, %v328
    %336 = vst.msk [vmem:[%s334] ss:$8 sm:$0x0] %vm333, %v328
    // Predicated region
    $region18: #{tpu_custom_call.1} parent=1 // pred_check
      _
    $region19: #{tpu_custom_call.1} parent=1 // pred_check_branch
      %338 = sbr.rel (0) target = $region21
    $region20: #{tpu_custom_call.1} parent=1 // pred_region
      %s340 = ssub.s32 512, 512
      %341 = vsyncadd [#allocation4], %s340
      %s342 = sshll.u32 [#allocation7], 4
      %s343 = int_to_ptr.vmem [resolvable:$true] %s342
      %348 = dma.vmem_to_hbm [thread:$0]  %s343, 512, %s2, [#allocation4], 256, 256, 16
    $region21: #{tpu_custom_call.1} parent=1 // pred_fallthru
      _
    // Predicated region
    $region22: #{tpu_custom_call.1} parent=1 // pred_check
      _
    $region23: #{tpu_custom_call.1} parent=1 // pred_check_branch
      %350 = sbr.rel (0) target = $region25
    $region24: #{tpu_custom_call.1} parent=1 // pred_region
      %351 = dma.done [#allocation4], 512
    $region25: #{tpu_custom_call.1} parent=1 // pred_fallthru
      _
    %352 = vsyncpa [#allocation3], 1
    %353 = vsyncpa [#allocation6], 1
    %354 = vsyncpa [#allocation4], 1

</llo_original>
